<compile_context>
chip_gen: v7x
topology: tpu7x:2x2x1
jax: 0.10.0
libtpu: 0.0.40
codegen_flags: <defaults>
</compile_context>

<pallas_src>
import functools

import jax
import jax.numpy as jnp
import numpy as np
from jax import lax
from jax.experimental import pallas as pl
from jax.experimental.pallas import tpu as pltpu


def _int_pow(u, g: int):
    """u**g for a static small positive integer g via repeated multiplies (VPU only)."""
    assert g >= 1
    result = None
    base = u
    while g > 0:
        if g & 1:
            result = base if result is None else result * base
        g >>= 1
        if g:
            base = base * base
    return result


def _focal_loss_kernel(logits_ref, target_ref, out_ref, *, gamma, alpha,
                       n_spatial, spatial_tile):
    j = pl.program_id(1)                                    # spatial tile index

    x = logits_ref[...].astype(jnp.float32)                 # (BN, C, TS)
    n_c = x.shape[1]

    # Numerically stable log-softmax pieces along the class (sublane) axis.
    m = jnp.max(x, axis=1, keepdims=True)                   # (BN, 1, TS)
    shifted = x - m
    sumexp = jnp.sum(jnp.exp(shifted), axis=1, keepdims=True)

    # One-hot gather of the target class along the class axis.
    tgt = target_ref[...].astype(jnp.int32)                  # (BN, 1, TS)
    cls = lax.broadcasted_iota(jnp.int32, x.shape, 1)        # (BN, C, TS)
    onehot = cls == tgt
    shifted_t = jnp.sum(jnp.where(onehot, shifted, 0.0), axis=1, keepdims=True)
    logpt = shifted_t - jnp.log(sumexp)                      # log_softmax at target

    g = float(gamma)
    if g != 0.0:
        # pt from the PRE-alpha logpt (matches the reference); one EUP exp on
        # only (BN,1,TS) elements, no reciprocal.  Clamp guards u**gamma
        # against pt > 1 rounding for non-integer gamma.
        pt = jnp.exp(logpt)
        u = jnp.maximum(1.0 - pt, 0.0)

    if alpha is not None:
        # alpha is a static tuple of per-class weights: unrolled scalar FMAs,
        # no constant arrays, no extra reductions.
        at = jnp.zeros_like(logpt)
        for c in range(n_c):
            at = at + jnp.float32(alpha[c]) * (tgt == c).astype(jnp.float32)
        logpt = logpt * at

    if g == 0.0:
        focal = -logpt
    elif g > 0.0 and g == int(g) and int(g) <= 8:
        focal = -_int_pow(u, int(g)) * logpt                 # VPU-only, no pow
    else:
        focal = -(u ** g) * logpt                            # general gamma

    if n_spatial % spatial_tile != 0:
        # Mask out-of-range spatial columns of the (possibly partial) last
        # tile; select does not propagate NaN from the uninitialized tail.
        col = lax.broadcasted_iota(jnp.int32, focal.shape, 2) + j * spatial_tile
        focal = jnp.where(col < n_spatial, focal, 0.0)

    # Per-tile partial sum (XLU has slack); one independent output block per
    # grid step so both parallel axes can be sharded across TensorCores.
    out_ref[...] = jnp.full(out_ref.shape, jnp.sum(focal), dtype=jnp.float32)


def focal_loss(logits_nchw, target_nhw, *, gamma=0.0, alpha=None,
               size_average=True, spatial_tile=None, batch_tile=None,
               vmem_limit_bytes=None):
    """Focal loss matching FocalLoss.forward semantics for NCHW inputs.

    logits_nchw: (N, C, H, W) float (f32 or bf16) logits
    target_nhw:  (N, H, W) integer class indices in [0, C)
    alpha: None, scalar (-> [a, 1-a]) or per-class list of length C.
    Returns a scalar (mean if size_average else sum).
    """
    N, C, H, W = logits_nchw.shape
    S = H * W

    # View-only reshapes: NCHW is consumed directly, no transpose pass.
    logits = logits_nchw.reshape(N, C, S)
    target = target_nhw.reshape(N, 1, S).astype(jnp.int32)

    # alpha is static python config -> baked into the kernel as constants.
    if isinstance(alpha, (float, int)) and not isinstance(alpha, bool):
        alpha_tuple = (float(alpha), 1.0 - float(alpha))
    elif isinstance(alpha, (list, tuple)):
        alpha_tuple = tuple(float(a) for a in alpha)
    else:
        alpha_tuple = None
    if alpha_tuple is not None:
        assert len(alpha_tuple) == C, "alpha must provide one weight per class"

    # Generation-aware VMEM budget: 3/4 of physical (128 MiB v5e/v6e -> 96,
    # 64 MiB v7x -> 48), capped; safe fallback if the query is unavailable.
    if vmem_limit_bytes is None:
        try:
            phys = getattr(pltpu.get_tpu_info(), "vmem_capacity_bytes",
                           64 * 1024 * 1024)
        except Exception:  # pragma: no cover - defensive
            phys = 64 * 1024 * 1024
        vmem_limit_bytes = min((int(phys) * 3) // 4, 100 * 1024 * 1024)

    S_pad = pl.cdiv(S, 128) * 128
    elem_bytes = jnp.dtype(logits.dtype).itemsize
    pos_bytes = C * elem_bytes + 4            # logits + int32 target per position
    per_block_budget = vmem_limit_bytes // 8  # 2x double-buffered inputs + temps headroom
    min_lanes = min(512, S_pad)               # never fall to the 128-lane floor

    if batch_tile is None:
        bn = N
        # Shrink bn along divisors of N until a >=min_lanes-wide block fits.
        while bn > 1 and bn * min_lanes * pos_bytes > per_block_budget:
            d = next(k for k in range(2, bn + 1) if bn % k == 0)
            bn //= d
        batch_tile = bn
    assert N % batch_tile == 0, "batch_tile must divide N"

    if spatial_tile is None:
        ts = per_block_budget // max(batch_tile * pos_bytes, 1)
        ts = max(min_lanes, (ts // 128) * 128)
        spatial_tile = min(ts, S_pad)
    assert spatial_tile % 128 == 0, "spatial tile must be a multiple of 128 lanes"

    num_bt = N // batch_tile
    num_st = pl.cdiv(S, spatial_tile)

    kernel = functools.partial(
        _focal_loss_kernel,
        gamma=float(gamma),
        alpha=alpha_tuple,
        n_spatial=S,
        spatial_tile=spatial_tile,
    )

    partials = pl.pallas_call(
        kernel,
        out_shape=jax.ShapeDtypeStruct((num_bt, num_st, 8, 128), jnp.float32),
        grid=(num_bt, num_st),
        in_specs=[
            pl.BlockSpec((batch_tile, C, spatial_tile), lambda b, j: (b, 0, j)),
            pl.BlockSpec((batch_tile, 1, spatial_tile), lambda b, j: (b, 0, j)),
        ],
        out_specs=pl.BlockSpec((1, 1, 8, 128), lambda b, j: (b, j, 0, 0)),
        compiler_params=pltpu.CompilerParams(
            dimension_semantics=("parallel", "parallel"),
            vmem_limit_bytes=int(vmem_limit_bytes)),
    )(logits, target)

    total = jnp.sum(partials[:, :, 0, 0])     # tiny final reduction in the wrapper
    if size_average:
        total = total / jnp.float32(N * S)
    return total


def _focal_loss_ref(logits_nchw, target_nhw, *, gamma, alpha, size_average):
    N, C, H, W = logits_nchw.shape
    x = jnp.transpose(logits_nchw, (0, 2, 3, 1)).reshape(-1, C).astype(jnp.float32)
    t = target_nhw.reshape(-1)
    logp = jax.nn.log_softmax(x, axis=1)
    logpt = jnp.take_along_axis(logp, t[:, None], axis=1)[:, 0]
    pt = jnp.exp(logpt)
    if alpha is not None:
        if isinstance(alpha, (float, int)):
            a = jnp.array([alpha, 1.0 - alpha], dtype=jnp.float32)
        else:
            a = jnp.array(alpha, dtype=jnp.float32)
        logpt = logpt * a[t]
    loss = -1.0 * (1.0 - pt) ** gamma * logpt
    return loss.mean() if size_average else loss.sum()


if __name__ == "__main__":
    key = jax.random.PRNGKey(0)
    k1, k2, k3, k4 = jax.random.split(key, 4)

    # Case 1: segmentation-style focal loss, gamma=2, per-class alpha, mean;
    # single large spatial tile, full-batch block.
    N, C, H, W = 2, 4, 16, 16
    gamma = 2.0
    alpha = [0.1, 0.2, 0.3, 0.4]
    logits = jax.random.normal(k1, (N, C, H, W), dtype=jnp.float32)
    target = jax.random.randint(k2, (N, H, W), 0, C, dtype=jnp.int32)

    loss = jax.block_until_ready(
        focal_loss(logits, target, gamma=gamma, alpha=alpha, size_average=True))
    ref = _focal_loss_ref(logits, target, gamma=gamma, alpha=alpha,
                          size_average=True)
    np.testing.assert_allclose(np.asarray(loss), np.asarray(ref),
                               rtol=1e-5, atol=1e-5)

    # Case 2: multi-tile + partial-last-tile masking (S not a multiple of the
    # lane tile) + batch grid axis, gamma=0, no alpha, sum.
    H2 = W2 = 18
    logits2 = jax.random.normal(k3, (N, C, H2, W2), dtype=jnp.float32)
    target2 = jax.random.randint(k4, (N, H2, W2), 0, C, dtype=jnp.int32)

    loss2 = jax.block_until_ready(
        focal_loss(logits2, target2, gamma=0.0, alpha=None, size_average=False,
                   spatial_tile=128, batch_tile=1))
    ref2 = _focal_loss_ref(logits2, target2, gamma=0.0, alpha=None,
                           size_average=False)
    np.testing.assert_allclose(np.asarray(loss2), np.asarray(ref2),
                               rtol=1e-5, atol=1e-4)

    # Case 3: bf16 logits (halved HBM stream), scalar alpha, non-integer gamma
    # (exercises the u = max(1-pt, 0) clamp).
    C3 = 2
    logits3 = jax.random.normal(k3, (N, C3, H, W), dtype=jnp.float32).astype(jnp.bfloat16)
    target3 = jax.random.randint(k4, (N, H, W), 0, C3, dtype=jnp.int32)

    loss3 = jax.block_until_ready(
        focal_loss(logits3, target3, gamma=1.5, alpha=0.25, size_average=True))
    ref3 = _focal_loss_ref(logits3.astype(jnp.float32), target3, gamma=1.5,
                           alpha=0.25, size_average=True)
    np.testing.assert_allclose(np.asarray(loss3), np.asarray(ref3),
                               rtol=1e-4, atol=1e-4)

    print("KERNEL_OK")
</pallas_src>

<mosaic_0001>
module attributes {stable_mosaic.version = 11 : i64} {
  func.func @_focal_loss_kernel(%arg0: i32, %arg1: i32, %arg2: memref<2x4x256xf32, #tpu.memory_space<vmem>>, %arg3: memref<2x1x256xi32, #tpu.memory_space<vmem>>, %arg4: memref<1x1x8x128xf32, #tpu.memory_space<vmem>>) attributes {dimension_semantics = [#tpu.dimension_semantics<parallel>, #tpu.dimension_semantics<parallel>], iteration_bounds = array<i64: 1, 1>, scalar_prefetch = 0 : i64, scratch_operands = 0 : i64, tpu.core_type = #tpu.core_type<tc>, window_params = [{transform_indices = @transform_0, window_bounds = array<i64: 2, 4, 256>}, {transform_indices = @transform_1, window_bounds = array<i64: 2, 1, 256>}, {transform_indices = @transform_2, window_bounds = array<i64: 1, 1, 8, 128>}]} {
    %c0 = arith.constant 0 : index
    %c0_0 = arith.constant 0 : index
    %c0_1 = arith.constant 0 : index
    %0 = vector.load %arg2[%c0, %c0_0, %c0_1] : memref<2x4x256xf32, #tpu.memory_space<vmem>>, vector<2x4x256xf32>
    %cst = arith.constant dense<0xFF800000> : vector<2x256xf32>
    %1 = vector.multi_reduction <maximumf>, %0, %cst [1] : vector<2x4x256xf32> to vector<2x256xf32>
    %2 = vector.shape_cast %1 : vector<2x256xf32> to vector<2x1x256xf32>
    %3 = vector.broadcast %2 : vector<2x1x256xf32> to vector<2x4x256xf32>
    %4 = arith.subf %0, %3 : vector<2x4x256xf32>
    %5 = math.exp %4 : vector<2x4x256xf32>
    %cst_2 = arith.constant dense<0.000000e+00> : vector<2x256xf32>
    %6 = vector.multi_reduction <add>, %5, %cst_2 [1] : vector<2x4x256xf32> to vector<2x256xf32>
    %7 = vector.shape_cast %6 : vector<2x256xf32> to vector<2x1x256xf32>
    %c0_3 = arith.constant 0 : index
    %c0_4 = arith.constant 0 : index
    %c0_5 = arith.constant 0 : index
    %8 = vector.load %arg3[%c0_3, %c0_4, %c0_5] : memref<2x1x256xi32, #tpu.memory_space<vmem>>, vector<2x1x256xi32>
    %9 = tpu.iota {dimensions = array<i32: 1>} : vector<2x4x256xi32>
    %10 = vector.broadcast %8 : vector<2x1x256xi32> to vector<2x4x256xi32>
    %11 = arith.cmpi eq, %9, %10 : vector<2x4x256xi32>
    %cst_6 = arith.constant 0.000000e+00 : f32
    %12 = vector.broadcast %cst_6 : f32 to vector<2x4x256xf32>
    %13 = arith.select %11, %4, %12 : vector<2x4x256xi1>, vector<2x4x256xf32>
    %cst_7 = arith.constant dense<0.000000e+00> : vector<2x256xf32>
    %14 = vector.multi_reduction <add>, %13, %cst_7 [1] : vector<2x4x256xf32> to vector<2x256xf32>
    %15 = vector.shape_cast %14 : vector<2x256xf32> to vector<2x1x256xf32>
    %16 = math.log %7 : vector<2x1x256xf32>
    %17 = arith.subf %15, %16 : vector<2x1x256xf32>
    %18 = math.exp %17 : vector<2x1x256xf32>
    %cst_8 = arith.constant 1.000000e+00 : f32
    %19 = vector.broadcast %cst_8 : f32 to vector<2x1x256xf32>
    %20 = arith.subf %19, %18 : vector<2x1x256xf32>
    %cst_9 = arith.constant 0.000000e+00 : f32
    %21 = vector.broadcast %cst_9 : f32 to vector<2x1x256xf32>
    %22 = arith.maximumf %20, %21 : vector<2x1x256xf32>
    %cst_10 = arith.constant 0.000000e+00 : f32
    %23 = vector.broadcast %cst_10 : f32 to vector<2x1x256xf32>
    %c0_i32 = arith.constant 0 : i32
    %24 = vector.broadcast %c0_i32 : i32 to vector<2x1x256xi32>
    %25 = arith.cmpi eq, %8, %24 : vector<2x1x256xi32>
    %26 = arith.extui %25 : vector<2x1x256xi1> to vector<2x1x256xi32>
    %27 = arith.sitofp %26 : vector<2x1x256xi32> to vector<2x1x256xf32>
    %cst_11 = arith.constant 1.000000e-01 : f32
    %28 = vector.broadcast %cst_11 : f32 to vector<2x1x256xf32>
    %29 = arith.mulf %28, %27 : vector<2x1x256xf32>
    %30 = arith.addf %23, %29 : vector<2x1x256xf32>
    %c1_i32 = arith.constant 1 : i32
    %31 = vector.broadcast %c1_i32 : i32 to vector<2x1x256xi32>
    %32 = arith.cmpi eq, %8, %31 : vector<2x1x256xi32>
    %33 = arith.extui %32 : vector<2x1x256xi1> to vector<2x1x256xi32>
    %34 = arith.sitofp %33 : vector<2x1x256xi32> to vector<2x1x256xf32>
    %cst_12 = arith.constant 2.000000e-01 : f32
    %35 = vector.broadcast %cst_12 : f32 to vector<2x1x256xf32>
    %36 = arith.mulf %35, %34 : vector<2x1x256xf32>
    %37 = arith.addf %30, %36 : vector<2x1x256xf32>
    %c2_i32 = arith.constant 2 : i32
    %38 = vector.broadcast %c2_i32 : i32 to vector<2x1x256xi32>
    %39 = arith.cmpi eq, %8, %38 : vector<2x1x256xi32>
    %40 = arith.extui %39 : vector<2x1x256xi1> to vector<2x1x256xi32>
    %41 = arith.sitofp %40 : vector<2x1x256xi32> to vector<2x1x256xf32>
    %cst_13 = arith.constant 3.000000e-01 : f32
    %42 = vector.broadcast %cst_13 : f32 to vector<2x1x256xf32>
    %43 = arith.mulf %42, %41 : vector<2x1x256xf32>
    %44 = arith.addf %37, %43 : vector<2x1x256xf32>
    %c3_i32 = arith.constant 3 : i32
    %45 = vector.broadcast %c3_i32 : i32 to vector<2x1x256xi32>
    %46 = arith.cmpi eq, %8, %45 : vector<2x1x256xi32>
    %47 = arith.extui %46 : vector<2x1x256xi1> to vector<2x1x256xi32>
    %48 = arith.sitofp %47 : vector<2x1x256xi32> to vector<2x1x256xf32>
    %cst_14 = arith.constant 4.000000e-01 : f32
    %49 = vector.broadcast %cst_14 : f32 to vector<2x1x256xf32>
    %50 = arith.mulf %49, %48 : vector<2x1x256xf32>
    %51 = arith.addf %44, %50 : vector<2x1x256xf32>
    %52 = arith.mulf %17, %51 : vector<2x1x256xf32>
    %53 = arith.mulf %22, %22 : vector<2x1x256xf32>
    %cst_15 = arith.constant 0.000000e+00 : f32
    %54 = vector.broadcast %cst_15 : f32 to vector<2x1x256xf32>
    %55 = arith.subf %54, %53 : vector<2x1x256xf32>
    %56 = arith.mulf %55, %52 : vector<2x1x256xf32>
    %57 = vector.shape_cast %56 : vector<2x1x256xf32> to vector<1x2x1x256xf32>
    %cst_16 = arith.constant dense<0.000000e+00> : vector<1xf32>
    %58 = vector.multi_reduction <add>, %57, %cst_16 [1, 2, 3] : vector<1x2x1x256xf32> to vector<1xf32>
    %59 = vector.shape_cast %58 : vector<1xf32> to vector<1x1x1x1xf32>
    %60 = vector.extract %59[0, 0, 0, 0] : f32 from vector<1x1x1x1xf32>
    %61 = vector.broadcast %60 : f32 to vector<1x1x8x128xf32>
    %c0_17 = arith.constant 0 : index
    %c0_18 = arith.constant 0 : index
    %c0_19 = arith.constant 0 : index
    %c0_20 = arith.constant 0 : index
    %62 = vector.load %arg4[%c0_17, %c0_18, %c0_19, %c0_20] : memref<1x1x8x128xf32, #tpu.memory_space<vmem>>, vector<1x1x8x128xf32>
    tpu.vector_store %arg4[%c0_17, %c0_18, %c0_19, %c0_20], %61 {strides = array<i32>} : memref<1x1x8x128xf32, #tpu.memory_space<vmem>>, vector<1x1x8x128xf32>,
    return
  }
  func.func @transform_0(%arg0: i32, %arg1: i32) -> (i32, i32, i32) {
    %c0_i32 = arith.constant 0 : i32
    %c0_i32_0 = arith.constant 0 : i32
    return %arg0, %c0_i32, %arg1 : i32, i32, i32
  }
  func.func @transform_1(%arg0: i32, %arg1: i32) -> (i32, i32, i32) {
    %c0_i32 = arith.constant 0 : i32
    %c0_i32_0 = arith.constant 0 : i32
    return %arg0, %c0_i32, %arg1 : i32, i32, i32
  }
  func.func @transform_2(%arg0: i32, %arg1: i32) -> (i32, i32, i32, i32) {
    %c0_i32 = arith.constant 0 : i32
    %c0_i32_0 = arith.constant 0 : i32
    %c0_i32_1 = arith.constant 0 : i32
    return %arg0, %arg1, %c0_i32, %c0_i32_0 : i32, i32, i32, i32
  }
}

</mosaic_0001>

<llo_original>
// kernel: tpu_custom_call.1
$region0: #{tpu_custom_call.1}
  #allocation0 [shape = 'u32[]', space=smem, size = 0x4, offset = 0x4, fixed_abs, tag = 'smem constant byte address 0x4 - core index']
  #allocation1 [shape = 'u32[144,128]{1,0:T(1,128)}', space=vmem, size = 0x12000, scoped, tag = 'internal scratch']
  %s0 = inlined_call_operand.hbm [shape: f32[2,4,256], index: 0, kind: input, shape index: {}]
  %s1 = inlined_call_operand.hbm [shape: s32[2,1,256], index: 1, kind: input, shape index: {}]
  %s2 = inlined_call_operand.hbm [shape: f32[1,1,8,128], index: 2, kind: output, shape index: {}]
  %s3 = sld [smem:[#allocation0]]
  $region26: #{tpu_custom_call.1} parent=0
    _
  %s5 = ssub.s32 1, %s3
  %s6 = scalar_select 0, %s5, %s3
  $region1: #{tpu_custom_call.1} parent=0
    #allocation2 [shape = 'u8[8192]{0}', space=vmem, size = 0x2000, scoped, tag = 'input window, operand 0, single buffered']
    #allocation3 [shape = 's32[1]{0}', space=sflag, size = 0x4, scoped, tag = 'scoped memory for tpu_custom_call.1']
    #allocation4 [shape = 's32[1]{0}', space=sflag, size = 0x4, scoped, tag = 'scoped memory for tpu_custom_call.1']
    #allocation5 [shape = 'u8[2048]{0}', space=vmem, size = 0x800, scoped, tag = 'input window, operand 1, single buffered']
    #allocation6 [shape = 's32[1]{0}', space=sflag, size = 0x4, scoped, tag = 'scoped memory for tpu_custom_call.1']
    #allocation7 [shape = 'u8[4096]{0}', space=vmem, size = 0x1000, scoped, tag = 'output window, operand 0, single buffered']
    %7 = vsyncpa [#allocation3], 0
    %8 = vsyncpa [#allocation6], 0
    %9 = vsyncpa [#allocation4], 0
    // Predicated region
    $region2: #{tpu_custom_call.1} parent=1 // pred_check
      _
    $region3: #{tpu_custom_call.1} parent=1 // pred_check_branch
      %11 = sbr.rel (0) target = $region5
    $region4: #{tpu_custom_call.1} parent=1 // pred_region
      %s13 = ssub.s32 256, 256
      %14 = vsyncadd [#allocation3], %s13
      %s15 = sshll.u32 [#allocation2], 4
      %s16 = int_to_ptr.vmem [resolvable:$true] %s15
      %21 = dma.hbm_to_vmem [thread:$0]  %s0, 256, %s16, [#allocation3], 128, 128, 8
    $region5: #{tpu_custom_call.1} parent=1 // pred_fallthru
      _
    // Predicated region
    $region6: #{tpu_custom_call.1} parent=1 // pred_check
      _
    $region7: #{tpu_custom_call.1} parent=1 // pred_check_branch
      %23 = sbr.rel (0) target = $region9
    $region8: #{tpu_custom_call.1} parent=1 // pred_region
      %s25 = ssub.s32 64, 64
      %26 = vsyncadd [#allocation6], %s25
      %s27 = sshll.u32 [#allocation5], 4
      %s28 = int_to_ptr.vmem [resolvable:$true] %s27
      %33 = dma.hbm_to_vmem [thread:$0]  %s1, 64, %s28, [#allocation6], 32, 32, 2
    $region9: #{tpu_custom_call.1} parent=1 // pred_fallthru
      _
    // Predicated region
    $region10: #{tpu_custom_call.1} parent=1 // pred_check
      _
    $region11: #{tpu_custom_call.1} parent=1 // pred_check_branch
      %35 = sbr.rel (0) target = $region13
    $region12: #{tpu_custom_call.1} parent=1 // pred_region
      %36 = dma.done [#allocation3], 256
    $region13: #{tpu_custom_call.1} parent=1 // pred_fallthru
      _
    // Predicated region
    $region14: #{tpu_custom_call.1} parent=1 // pred_check
      _
    $region15: #{tpu_custom_call.1} parent=1 // pred_check_branch
      %38 = sbr.rel (0) target = $region17
    $region16: #{tpu_custom_call.1} parent=1 // pred_region
      %39 = dma.done [#allocation6], 64
    $region17: #{tpu_custom_call.1} parent=1 // pred_fallthru
      _
    %v40 = vld [vmem:[#allocation2] sm:$0xff]
    %v41 = vld [vmem:[#allocation2 + $0x8] sm:$0xff]
    %v44 = vcombine.high %v40, %v40
    %v45 = vcombine.high %v41, %v41
    %vm48 = vcmask 1043456
    %v49 = vsel %vm48, %v40, -inf
    %v50 = vrot.slane %v49, 4
    %v51 = vmax.f32 %v49, %v50
    %v52 = vrot.slane %v51, 2
    %v53 = vmax.f32 %v51, %v52
    %v54 = vrot.slane %v53, 1
    %v55 = vmax.f32 %v53, %v54
    %v56 = vsel %vm48, %v44, -inf
    %v57 = vrot.slane %v56, 4
    %v58 = vmax.f32 %v56, %v57
    %v59 = vrot.slane %v58, 2
    %v60 = vmax.f32 %v58, %v59
    %v61 = vrot.slane %v60, 1
    %v62 = vmax.f32 %v60, %v61
    %v63 = vsel %vm48, %v41, -inf
    %v64 = vrot.slane %v63, 4
    %v65 = vmax.f32 %v63, %v64
    %v66 = vrot.slane %v65, 2
    %v67 = vmax.f32 %v65, %v66
    %v68 = vrot.slane %v67, 1
    %v69 = vmax.f32 %v67, %v68
    %v70 = vsel %vm48, %v45, -inf
    %v71 = vrot.slane %v70, 4
    %v72 = vmax.f32 %v70, %v71
    %v73 = vrot.slane %v72, 2
    %v74 = vmax.f32 %v72, %v73
    %v75 = vrot.slane %v74, 1
    %v76 = vmax.f32 %v74, %v75
    %v81 = vcombine.low %v55, %v62
    %v82 = vcombine.low %v69, %v76
    %v85 = vsub.f32 %v40, %v81
    %v86 = vsub.f32 %v41, %v82
    %v87 = vmul.f32 %v85, 1.442695
    %v88 = vpow.pop %v87
    %v89 = vmul.f32 %v86, 1.442695
    %v90 = vpow.pop %v89
    %v93 = vcombine.high %v88, %v88
    %v94 = vcombine.high %v90, %v90
    %v97 = vsel %vm48, %v88, 0.0
    %v98 = vrot.slane %v97, 4
    %v99 = vadd.f32 %v97, %v98
    %v100 = vrot.slane %v99, 2
    %v101 = vadd.f32 %v99, %v100
    %v102 = vrot.slane %v101, 1
    %v103 = vadd.f32 %v101, %v102
    %v104 = vsel %vm48, %v93, 0.0
    %v105 = vrot.slane %v104, 4
    %v106 = vadd.f32 %v104, %v105
    %v107 = vrot.slane %v106, 2
    %v108 = vadd.f32 %v106, %v107
    %v109 = vrot.slane %v108, 1
    %v110 = vadd.f32 %v108, %v109
    %v111 = vsel %vm48, %v90, 0.0
    %v112 = vrot.slane %v111, 4
    %v113 = vadd.f32 %v111, %v112
    %v114 = vrot.slane %v113, 2
    %v115 = vadd.f32 %v113, %v114
    %v116 = vrot.slane %v115, 1
    %v117 = vadd.f32 %v115, %v116
    %v118 = vsel %vm48, %v94, 0.0
    %v119 = vrot.slane %v118, 4
    %v120 = vadd.f32 %v118, %v119
    %v121 = vrot.slane %v120, 2
    %v122 = vadd.f32 %v120, %v121
    %v123 = vrot.slane %v122, 1
    %v124 = vadd.f32 %v122, %v123
    %v125 = vld [vmem:[#allocation5] sm:$0x3]
    %v126 = vld [vmem:[#allocation5 + $0x2] sm:$0x3]
    %v127 = vlaneseq
    %v128 = vshrl.u32 %v127, 7
    %v129 = vlaneseq
    %v130 = vshrl.u32 %v129, 7
    %v131 = vsub.s32 0, %v130
    %v132 = vrot.slane %v125, %v131
    %v133 = vlaneseq
    %v134 = vshrl.u32 %v133, 7
    %v135 = vsub.s32 1, %v134
    %v136 = vrot.slane %v125, %v135
    %v137 = vlaneseq
    %v138 = vshrl.u32 %v137, 7
    %v139 = vsub.s32 0, %v138
    %v140 = vrot.slane %v126, %v139
    %v141 = vlaneseq
    %v142 = vshrl.u32 %v141, 7
    %v143 = vsub.s32 1, %v142
    %v144 = vrot.slane %v126, %v143
    %vm145 = vcmp.eq.s32.totalorder %v128, %v132
    %vm146 = vcmp.eq.s32.totalorder %v128, %v136
    %vm147 = vcmp.eq.s32.totalorder %v128, %v140
    %vm148 = vcmp.eq.s32.totalorder %v128, %v144
    %v151 = vcombine.high %v85, %v85
    %v152 = vcombine.high %v86, %v86
    %v155 = vsel %vm145, %v85, 0.0
    %v156 = vsel %vm146, %v151, 0.0
    %v157 = vsel %vm147, %v86, 0.0
    %v158 = vsel %vm148, %v152, 0.0
    %v159 = vsel %vm48, %v155, 0.0
    %v160 = vrot.slane %v159, 4
    %v161 = vadd.f32 %v159, %v160
    %v162 = vrot.slane %v161, 2
    %v163 = vadd.f32 %v161, %v162
    %v164 = vrot.slane %v163, 1
    %v165 = vadd.f32 %v163, %v164
    %v166 = vsel %vm48, %v156, 0.0
    %v167 = vrot.slane %v166, 4
    %v168 = vadd.f32 %v166, %v167
    %v169 = vrot.slane %v168, 2
    %v170 = vadd.f32 %v168, %v169
    %v171 = vrot.slane %v170, 1
    %v172 = vadd.f32 %v170, %v171
    %v173 = vsel %vm48, %v157, 0.0
    %v174 = vrot.slane %v173, 4
    %v175 = vadd.f32 %v173, %v174
    %v176 = vrot.slane %v175, 2
    %v177 = vadd.f32 %v175, %v176
    %v178 = vrot.slane %v177, 1
    %v179 = vadd.f32 %v177, %v178
    %v180 = vsel %vm48, %v158, 0.0
    %v181 = vrot.slane %v180, 4
    %v182 = vadd.f32 %v180, %v181
    %v183 = vrot.slane %v182, 2
    %v184 = vadd.f32 %v182, %v183
    %v185 = vrot.slane %v184, 1
    %v186 = vadd.f32 %v184, %v185
    %v187 = vlog2.pop %v103
    %v188 = vmul.f32 %v187, 0.6931472
    %v189 = vlog2.pop %v110
    %v190 = vmul.f32 %v189, 0.6931472
    %v191 = vlog2.pop %v117
    %v192 = vmul.f32 %v191, 0.6931472
    %v193 = vlog2.pop %v124
    %v194 = vmul.f32 %v193, 0.6931472
    %v195 = vsub.f32 %v165, %v188
    %v196 = vsub.f32 %v172, %v190
    %v197 = vsub.f32 %v179, %v192
    %v198 = vsub.f32 %v186, %v194
    %v199 = vmul.f32 %v195, 1.442695
    %v200 = vpow.pop %v199
    %v201 = vmul.f32 %v196, 1.442695
    %v202 = vpow.pop %v201
    %v203 = vmul.f32 %v197, 1.442695
    %v204 = vpow.pop %v203
    %v205 = vmul.f32 %v198, 1.442695
    %v206 = vpow.pop %v205
    %v207 = vsub.f32 1.0, %v200
    %v208 = vsub.f32 1.0, %v202
    %v209 = vsub.f32 1.0, %v204
    %v210 = vsub.f32 1.0, %v206
    %v211 = vmax.f32 %v207, 0.0
    %v212 = vmax.f32 %v208, 0.0
    %v213 = vmax.f32 %v209, 0.0
    %v214 = vmax.f32 %v210, 0.0
    %vm215 = vcmp.eq.s32.totalorder %v125, 0
    %vm216 = vcmp.eq.s32.totalorder %v126, 0
    %v217 = vsel %vm215, 1, 0
    %v218 = vsel %vm216, 1, 0
    %v219 = vcvt.s32.f32 %v217
    %v220 = vcvt.s32.f32 %v218
    %v221 = vmul.f32 %v219, 0.1
    %v222 = vmul.f32 %v220, 0.1
    %v223 = vadd.f32 %v221, 0.0
    %v224 = vadd.f32 %v222, 0.0
    %vm225 = vcmp.eq.s32.totalorder %v125, 1
    %vm226 = vcmp.eq.s32.totalorder %v126, 1
    %v227 = vsel %vm225, 1, 0
    %v228 = vsel %vm226, 1, 0
    %v229 = vcvt.s32.f32 %v227
    %v230 = vcvt.s32.f32 %v228
    %v231 = vmul.f32 %v229, 0.2
    %v232 = vmul.f32 %v230, 0.2
    %v233 = vadd.f32 %v223, %v231
    %v234 = vadd.f32 %v224, %v232
    %vm235 = vcmp.eq.s32.totalorder %v125, 2
    %vm236 = vcmp.eq.s32.totalorder %v126, 2
    %v237 = vsel %vm235, 1, 0
    %v238 = vsel %vm236, 1, 0
    %v239 = vcvt.s32.f32 %v237
    %v240 = vcvt.s32.f32 %v238
    %v241 = vmul.f32 %v239, 0.3
    %v242 = vmul.f32 %v240, 0.3
    %v243 = vadd.f32 %v233, %v241
    %v244 = vadd.f32 %v234, %v242
    %vm245 = vcmp.eq.s32.totalorder %v125, 3
    %vm246 = vcmp.eq.s32.totalorder %v126, 3
    %v247 = vsel %vm245, 1, 0
    %v248 = vsel %vm246, 1, 0
    %v249 = vcvt.s32.f32 %v247
    %v250 = vcvt.s32.f32 %v248
    %v251 = vmul.f32 %v249, 0.4
    %v252 = vmul.f32 %v250, 0.4
    %v253 = vadd.f32 %v243, %v251
    %v254 = vadd.f32 %v244, %v252
    %v257 = vlaneseq
    %v258 = vshrl.u32 %v257, 7
    %v259 = vsub.s32 0, %v258
    %v260 = vrot.slane %v253, %v259
    %v261 = vlaneseq
    %v262 = vshrl.u32 %v261, 7
    %v263 = vsub.s32 1, %v262
    %v264 = vrot.slane %v253, %v263
    %v265 = vlaneseq
    %v266 = vshrl.u32 %v265, 7
    %v267 = vsub.s32 0, %v266
    %v268 = vrot.slane %v254, %v267
    %v269 = vlaneseq
    %v270 = vshrl.u32 %v269, 7
    %v271 = vsub.s32 1, %v270
    %v272 = vrot.slane %v254, %v271
    %v277 = vmul.f32 %v195, %v260
    %v278 = vmul.f32 %v196, %v264
    %v279 = vmul.f32 %v197, %v268
    %v280 = vmul.f32 %v198, %v272
    %v281 = vmul.f32 %v211, %v211
    %v282 = vmul.f32 %v212, %v212
    %v283 = vmul.f32 %v213, %v213
    %v284 = vmul.f32 %v214, %v214
    %v285 = vsub.f32 0.0, %v281
    %v286 = vsub.f32 0.0, %v282
    %v287 = vsub.f32 0.0, %v283
    %v288 = vsub.f32 0.0, %v284
    %v289 = vmul.f32 %v285, %v277
    %v290 = vmul.f32 %v286, %v278
    %v291 = vmul.f32 %v287, %v279
    %v292 = vmul.f32 %v288, %v280
    %vm293 = vcmask 1040384
    %v294 = vsel %vm293, %v289, 0.0
    %v295 = vsel %vm293, %v290, 0.0
    %v296 = vadd.f32 %v294, %v295
    %v297 = vsel %vm293, %v291, 0.0
    %v298 = vadd.f32 %v296, %v297
    %v299 = vsel %vm293, %v292, 0.0
    %v300 = vadd.f32 %v298, %v299
    %301 = vadd.xlane.f32.xlu0 %v300
    %v302 = vpop.xlane.xlu0 %301
    %v303 = vrot.slane %v302, 4
    %v304 = vadd.f32 %v302, %v303
    %v305 = vrot.slane %v304, 2
    %v306 = vadd.f32 %v304, %v305
    %v307 = vrot.slane %v306, 1
    %v308 = vadd.f32 %v306, %v307
    %s309 = vtos %v308
    %v310 = vstv %s309
    %311 = vst [vmem:[#allocation7] sm:$0xff] %v310
    // Predicated region
    $region18: #{tpu_custom_call.1} parent=1 // pred_check
      _
    $region19: #{tpu_custom_call.1} parent=1 // pred_check_branch
      %313 = sbr.rel (0) target = $region21
    $region20: #{tpu_custom_call.1} parent=1 // pred_region
      %s315 = ssub.s32 128, 128
      %316 = vsyncadd [#allocation4], %s315
      %s318 = sshll.u32 [#allocation7], 4
      %s319 = int_to_ptr.vmem [resolvable:$true] %s318
      %321 = dma.vmem_to_hbm [thread:$0]  %s319, 128, %s2, [#allocation4]
    $region21: #{tpu_custom_call.1} parent=1 // pred_fallthru
      _
    // Predicated region
    $region22: #{tpu_custom_call.1} parent=1 // pred_check
      _
    $region23: #{tpu_custom_call.1} parent=1 // pred_check_branch
      %323 = sbr.rel (0) target = $region25
    $region24: #{tpu_custom_call.1} parent=1 // pred_region
      %324 = dma.done [#allocation4], 128
    $region25: #{tpu_custom_call.1} parent=1 // pred_fallthru
      _
    %325 = vsyncpa [#allocation3], 1
    %326 = vsyncpa [#allocation6], 1
    %327 = vsyncpa [#allocation4], 1

</llo_original>
